<compile_context>
chip_gen: v5e
topology: v5e:2x2
jax: 0.10.0
libtpu: 0.0.40
codegen_flags: <defaults>
</compile_context>

<pallas_src>
import functools

import jax
import jax.numpy as jnp
from jax.experimental import pallas as pl
from jax.experimental.pallas import tpu as pltpu


def _round_up(x, m):
    return ((x + m - 1) // m) * m


def _sublane_min(dtype):
    return {4: 8, 2: 16, 1: 32}.get(jnp.dtype(dtype).itemsize, 8)


def _vmem_capacity_bytes():
    try:
        cap = getattr(pltpu.get_tpu_info(), "vmem_capacity_bytes", None)
        if cap:
            return int(cap)
    except Exception:
        pass
    return 64 * 1024 * 1024  # conservative (v7x per-TC)


# ---------------------------------------------------------------------------
# Kernels
# ---------------------------------------------------------------------------
def _ctx_attn_fast_kernel(x_ref, aa_ref, ab_ref, ac_ref, ad_ref,
                          wv_ref, bv_ref, o_ref):
    """kv = relu(x*a + b)*c + d ; out = kv @ Wv^T + bv  (softmax over 1 key == 1)."""
    xf = x_ref[...].astype(jnp.float32)
    kv = (jnp.maximum(xf * aa_ref[...] + ab_ref[...], 0.0)
          * ac_ref[...] + ad_ref[...]).astype(wv_ref.dtype)
    v = jnp.dot(kv, wv_ref[...], preferred_element_type=jnp.float32) + bv_ref[...]
    o_ref[...] = v.astype(o_ref.dtype)


def _ctx_attn_faithful_kernel(x_ref, wq_ref, bq_ref, aa_ref, ab_ref, ac_ref,
                              ad_ref, wk_ref, bk_ref, wv_ref, bv_ref,
                              hsel_ref, o_ref, *, scale):
    """Debug path: keeps the (dead) q/k/logit/softmax chain op-for-op."""
    x = x_ref[...]
    q = jnp.dot(x, wq_ref[...], preferred_element_type=jnp.float32) + bq_ref[...]
    xf = x.astype(jnp.float32)
    kv = (jnp.maximum(xf * aa_ref[...] + ab_ref[...], 0.0)
          * ac_ref[...] + ad_ref[...]).astype(wk_ref.dtype)
    k = jnp.dot(kv, wk_ref[...], preferred_element_type=jnp.float32) + bk_ref[...]
    v = jnp.dot(kv, wv_ref[...], preferred_element_type=jnp.float32) + bv_ref[...]
    # Block-diagonal head selector sums q*k within each head and broadcasts the
    # per-head logit back onto its channels (lane-dense, no reshapes).
    qk = (q * k).astype(hsel_ref.dtype)
    logits = jnp.dot(qk, hsel_ref[...], preferred_element_type=jnp.float32) * scale
    p = jnp.exp(logits - logits)  # softmax over ONE key == 1 (keeps NaN/inf semantics)
    o_ref[...] = (p * v).astype(o_ref.dtype)


# ---------------------------------------------------------------------------
# One-time parameter folding (hoisted out of the per-call hot path).
# ---------------------------------------------------------------------------
def fold_context_attention_params(params, *, dim, num_heads=8, sr_ratio=2,
                                  eps=1e-5, compute_dtype=jnp.bfloat16,
                                  faithful=False):
    C = dim
    assert C % num_heads == 0
    if sr_ratio <= 1:
        raise NotImplementedError("sr_ratio == 1 (nn.Identity sr) not implemented")
    hd = C // num_heads
    Cp = _round_up(C, 128)
    compute_dtype = jnp.dtype(compute_dtype)

    # 1x1 convs -> row-wise linears.
    q_w = params["q_w"][:, :, 0, 0]                    # (C, C)  (out, in)
    q_b = params["q_b"]
    kv_w = params["kv_w"][:, :, 0, 0]                  # (2C, C)
    kv_b = params["kv_b"]
    k_w, v_w = kv_w[:C], kv_w[C:]
    k_b, v_b = kv_b[:C], kv_b[C:]

    # sr() + local_conv residual -> kv = relu(x*a + b)*c + d   (per channel)
    ksz = sr_ratio + 3                                 # only the center tap hits a 1x1 map
    sr1 = params["sr1_w"][:, 0, ksz // 2, ksz // 2]
    sr2 = params["sr2_w"][:, 0, 0, 0]
    g1 = params["bn1_gamma"] * jax.lax.rsqrt(params["bn1_var"] + eps)
    g2 = params["bn2_gamma"] * jax.lax.rsqrt(params["bn2_var"] + eps)
    a1 = sr1 * g1
    b1 = params["bn1_beta"] - params["bn1_mean"] * g1
    a2 = sr2 * g2
    b2 = params["bn2_beta"] - params["bn2_mean"] * g2
    lc_s = 1.0 + params["lc_w"][:, 0, 1, 1]            # local_conv center tap + residual
    lc_b = params["lc_b"]
    aff_a, aff_b = a1, b1
    aff_c, aff_d = a2 * lc_s, b2 * lc_s + lc_b

    def pad_row(v, dtype=jnp.float32):
        return jnp.pad(v.astype(jnp.float32), (0, Cp - C)).reshape(1, Cp).astype(dtype)

    def pad_mat(m, dtype):
        return jnp.pad(m.astype(jnp.float32),
                       ((0, Cp - C), (0, Cp - C))).astype(dtype)

    folded = {
        "C": C, "Cp": Cp, "hd": hd, "num_heads": num_heads,
        "compute_dtype": compute_dtype, "faithful": bool(faithful),
        "wv_t": pad_mat(v_w.T, compute_dtype),
        "bv": pad_row(v_b),
        "aff_a": pad_row(aff_a), "aff_b": pad_row(aff_b),
        "aff_c": pad_row(aff_c), "aff_d": pad_row(aff_d),
    }
    if faithful:
        head_id = jnp.arange(Cp) // hd                 # padded channels -> pseudo-heads
        folded.update({
            "wq_t": pad_mat(q_w.T, compute_dtype),
            "bq": pad_row(q_b),
            "wk_t": pad_mat(k_w.T, compute_dtype),
            "bk": pad_row(k_b),
            # 0/1 is exact in bf16; storing in compute_dtype halves its VMEM.
            "hsel": (head_id[:, None] == head_id[None, :]).astype(compute_dtype),
        })
    return folded


# ---------------------------------------------------------------------------
# Forward: pad rows, launch pallas_call.
# ---------------------------------------------------------------------------
def context_attention_forward(x, folded, *, qk_scale=None, tm=256, tn=None):
    rows, C = x.shape
    assert C == folded["C"]
    Cp, hd = folded["Cp"], folded["hd"]
    compute_dtype = folded["compute_dtype"]
    faithful = folded["faithful"]
    scale = float(qk_scale) if qk_scale is not None else float(hd) ** -0.5

    sub = max(_sublane_min(compute_dtype), 8)
    tm_eff = max(sub, min(_round_up(tm, sub), _round_up(rows, sub)))
    Rp = _round_up(rows, tm_eff)
    ni = Rp // tm_eff

    # Optional output-channel tiling (fast path only): when the row grid
    # collapses to a single program, split channels so both v7x TCs get work.
    if faithful or tn is None:
        if (not faithful) and ni == 1 and Cp % 256 == 0:
            tn_eff = Cp // 2
        else:
            tn_eff = Cp
    else:
        tn_eff = tn
    assert Cp % tn_eff == 0 and tn_eff % 128 == 0
    nj = Cp // tn_eff

    xp = jnp.pad(x.astype(jnp.float32),
                 ((0, Rp - rows), (0, Cp - C))).astype(compute_dtype)

    itemsize = jnp.dtype(compute_dtype).itemsize
    out_itemsize = jnp.dtype(x.dtype).itemsize
    cap = _vmem_capacity_bytes()

    if not faithful:
        wv_const = (nj == 1)

        def build(single_buffer):
            cb = {"pipeline_mode": pl.Buffered(1)} if single_buffer else {}
            wv_kw = cb if wv_const else {}
            in_specs = [
                pl.BlockSpec((tm_eff, Cp), lambda i, j: (i, 0)),          # x row tile
                pl.BlockSpec((1, Cp), lambda i, j: (0, 0), **cb),          # aff a
                pl.BlockSpec((1, Cp), lambda i, j: (0, 0), **cb),          # aff b
                pl.BlockSpec((1, Cp), lambda i, j: (0, 0), **cb),          # aff c
                pl.BlockSpec((1, Cp), lambda i, j: (0, 0), **cb),          # aff d
                pl.BlockSpec((Cp, tn_eff), lambda i, j: (0, j), **wv_kw),  # Wv^T
                pl.BlockSpec((1, tn_eff), lambda i, j: (0, j), **wv_kw),   # b_v
            ]
            out_spec = pl.BlockSpec((tm_eff, tn_eff), lambda i, j: (i, j))

            n_wv_buf = 1 if (single_buffer and wv_const) else 2
            need = (2 * tm_eff * Cp * itemsize                 # x tile (double-buffered)
                    + 2 * tm_eff * tn_eff * out_itemsize       # out tile
                    + n_wv_buf * (Cp * tn_eff * itemsize + 128 * 4)
                    + 8 * Cp * 4                               # affines
                    + 4 * tm_eff * Cp * 4)                     # f32 intermediates
            vmem_limit = int(min(max(2 * need, 32 << 20), cap - (16 << 20)))

            cost = pl.CostEstimate(
                flops=2 * Rp * Cp * Cp + 6 * Rp * Cp, transcendentals=0,
                bytes_accessed=int(Rp * Cp * (itemsize + out_itemsize)
                                   + Cp * Cp * itemsize + 6 * Cp * 4))

            return pl.pallas_call(
                _ctx_attn_fast_kernel,
                out_shape=jax.ShapeDtypeStruct((Rp, Cp), x.dtype),
                grid_spec=pltpu.PrefetchScalarGridSpec(
                    num_scalar_prefetch=0, grid=(ni, nj),
                    in_specs=in_specs, out_specs=out_spec),
                compiler_params=pltpu.CompilerParams(
                    dimension_semantics=("parallel", "parallel"),
                    vmem_limit_bytes=vmem_limit),
                cost_estimate=cost)

        args = (xp, folded["aff_a"], folded["aff_b"], folded["aff_c"],
                folded["aff_d"], folded["wv_t"], folded["bv"])
        try:
            out_p = build(True)(*args)
            out_p.block_until_ready()
        except Exception:
            # Toolchain without single-buffer (Buffered(1)) support: fall back.
            out_p = build(False)(*args)
    else:
        def build(single_buffer):
            cb = {"pipeline_mode": pl.Buffered(1)} if single_buffer else {}
            in_specs = [
                pl.BlockSpec((tm_eff, Cp), lambda i: (i, 0)),        # x row tile
                pl.BlockSpec((Cp, Cp), lambda i: (0, 0), **cb),      # Wq^T
                pl.BlockSpec((1, Cp), lambda i: (0, 0), **cb),       # b_q
                pl.BlockSpec((1, Cp), lambda i: (0, 0), **cb),       # aff a
                pl.BlockSpec((1, Cp), lambda i: (0, 0), **cb),       # aff b
                pl.BlockSpec((1, Cp), lambda i: (0, 0), **cb),       # aff c
                pl.BlockSpec((1, Cp), lambda i: (0, 0), **cb),       # aff d
                pl.BlockSpec((Cp, Cp), lambda i: (0, 0), **cb),      # Wk^T
                pl.BlockSpec((1, Cp), lambda i: (0, 0), **cb),       # b_k
                pl.BlockSpec((Cp, Cp), lambda i: (0, 0), **cb),      # Wv^T
                pl.BlockSpec((1, Cp), lambda i: (0, 0), **cb),       # b_v
                pl.BlockSpec((Cp, Cp), lambda i: (0, 0), **cb),      # head selector
            ]
            out_spec = pl.BlockSpec((tm_eff, Cp), lambda i: (i, 0))

            n_buf = 1 if single_buffer else 2
            need = (2 * tm_eff * Cp * (itemsize + out_itemsize)
                    + n_buf * 4 * Cp * Cp * itemsize
                    + 16 * Cp * 4
                    + 8 * tm_eff * Cp * 4)
            vmem_limit = int(min(max(2 * need, 32 << 20), cap - (16 << 20)))

            cost = pl.CostEstimate(
                flops=8 * Rp * Cp * Cp + 16 * Rp * Cp, transcendentals=Rp * Cp,
                bytes_accessed=int(Rp * Cp * (itemsize + out_itemsize)
                                   + 4 * Cp * Cp * itemsize))

            return pl.pallas_call(
                functools.partial(_ctx_attn_faithful_kernel, scale=scale),
                out_shape=jax.ShapeDtypeStruct((Rp, Cp), x.dtype),
                grid_spec=pltpu.PrefetchScalarGridSpec(
                    num_scalar_prefetch=0, grid=(ni,),
                    in_specs=in_specs, out_specs=out_spec),
                compiler_params=pltpu.CompilerParams(
                    dimension_semantics=("parallel",),
                    vmem_limit_bytes=vmem_limit),
                cost_estimate=cost)

        args = (xp, folded["wq_t"], folded["bq"], folded["aff_a"],
                folded["aff_b"], folded["aff_c"], folded["aff_d"],
                folded["wk_t"], folded["bk"], folded["wv_t"], folded["bv"],
                folded["hsel"])
        try:
            out_p = build(True)(*args)
            out_p.block_until_ready()
        except Exception:
            out_p = build(False)(*args)

    return out_p[:rows, :C]


# ---------------------------------------------------------------------------
# Pure-JAX op-for-op reference (mirrors the PyTorch forward, eval-mode BN).
# ---------------------------------------------------------------------------
def context_attention_reference(x2d, params, *, num_heads=8, qk_scale=None,
                                sr_ratio=2, eps=1e-5):
    B, C = x2d.shape
    hd = C // num_heads
    scale = qk_scale if qk_scale is not None else hd ** -0.5
    x = x2d.reshape(B, C, 1, 1)
    hi = jax.lax.Precision.HIGHEST

    def conv(inp, w, b=None, stride=1, padding=0, groups=1):
        out = jax.lax.conv_general_dilated(
            inp, w, window_strides=(stride, stride),
            padding=[(padding, padding), (padding, padding)],
            dimension_numbers=("NCHW", "OIHW", "NCHW"),
            feature_group_count=groups, precision=hi)
        if b is not None:
            out = out + b.reshape(1, -1, 1, 1)
        return out

    def bn(inp, g, beta, mean, var):
        s = (g * jax.lax.rsqrt(var + eps)).reshape(1, -1, 1, 1)
        return (inp - mean.reshape(1, -1, 1, 1)) * s + beta.reshape(1, -1, 1, 1)

    q = conv(x, params["q_w"], params["q_b"])
    q = q.reshape(B, num_heads, hd, -1).transpose(0, 1, 3, 2)          # (B,nh,1,hd)

    kv = conv(x, params["sr1_w"], stride=sr_ratio,
              padding=(sr_ratio + 3) // 2, groups=C)
    kv = bn(kv, params["bn1_gamma"], params["bn1_beta"],
            params["bn1_mean"], params["bn1_var"])
    kv = jnp.maximum(kv, 0.0)
    kv = conv(kv, params["sr2_w"], groups=C)
    kv = bn(kv, params["bn2_gamma"], params["bn2_beta"],
            params["bn2_mean"], params["bn2_var"])
    kv = conv(kv, params["lc_w"], params["lc_b"], padding=1, groups=C) + kv

    full = conv(kv, params["kv_w"], params["kv_b"])                    # (B,2C,1,1)
    k, v = full[:, :C], full[:, C:]
    k = k.reshape(B, num_heads, hd, -1)                                # (B,nh,hd,1)
    v = v.reshape(B, num_heads, hd, -1).transpose(0, 1, 3, 2)          # (B,nh,1,hd)

    attn = jnp.matmul(q, k, precision=hi) * scale                      # (B,nh,1,1)
    attn = jax.nn.softmax(attn, axis=-1)
    out = jnp.matmul(attn, v, precision=hi).transpose(0, 1, 3, 2)      # (B,nh,hd,1)
    return out.reshape(B, C)


if __name__ == "__main__":
    batch, dim, num_heads, sr_ratio = 2, 32, 8, 2
    C = dim
    ksz = sr_ratio + 3

    key = jax.random.PRNGKey(0)
    ks = jax.random.split(key, 18)

    x = jax.random.normal(ks[0], (batch, C), jnp.float32)
    params = {
        "q_w":  jax.random.normal(ks[1], (C, C, 1, 1), jnp.float32) * 0.1,
        "q_b":  jax.random.normal(ks[2], (C,), jnp.float32) * 0.1,
        "kv_w": jax.random.normal(ks[3], (2 * C, C, 1, 1), jnp.float32) * 0.1,
        "kv_b": jax.random.normal(ks[4], (2 * C,), jnp.float32) * 0.1,
        "sr1_w": jax.random.normal(ks[5], (C, 1, ksz, ksz), jnp.float32) * 0.1,
        "bn1_gamma": 1.0 + 0.1 * jax.random.normal(ks[6], (C,), jnp.float32),
        "bn1_beta":  0.1 * jax.random.normal(ks[7], (C,), jnp.float32),
        "bn1_mean":  0.1 * jax.random.normal(ks[8], (C,), jnp.float32),
        "bn1_var":   jax.random.uniform(ks[9], (C,), jnp.float32, 0.5, 1.5),
        "sr2_w": jax.random.normal(ks[10], (C, 1, 1, 1), jnp.float32) * 0.1,
        "bn2_gamma": 1.0 + 0.1 * jax.random.normal(ks[11], (C,), jnp.float32),
        "bn2_beta":  0.1 * jax.random.normal(ks[12], (C,), jnp.float32),
        "bn2_mean":  0.1 * jax.random.normal(ks[13], (C,), jnp.float32),
        "bn2_var":   jax.random.uniform(ks[14], (C,), jnp.float32, 0.5, 1.5),
        "lc_w": jax.random.normal(ks[15], (C, 1, 3, 3), jnp.float32) * 0.1,
        "lc_b": jax.random.normal(ks[16], (C,), jnp.float32) * 0.1,
    }

    ref = context_attention_reference(x, params, num_heads=num_heads,
                                      sr_ratio=sr_ratio)

    # --- default fast path: dead compute removed, bf16 MXU operands --------
    folded_fast = fold_context_attention_params(
        params, dim=dim, num_heads=num_heads, sr_ratio=sr_ratio,
        compute_dtype=jnp.bfloat16, faithful=False)
    out_fast = context_attention_forward(x, folded_fast)
    jax.block_until_ready(out_fast)
    assert out_fast.shape == (batch, dim)
    err_fast = float(jnp.max(jnp.abs(out_fast - ref)))
    assert err_fast < 3e-2, f"fast-path mismatch vs reference (max abs err {err_fast})"

    # --- faithful debug path (all ops kept, f32) ----------------------------
    folded_faithful = fold_context_attention_params(
        params, dim=dim, num_heads=num_heads, sr_ratio=sr_ratio,
        compute_dtype=jnp.float32, faithful=True)
    out_faithful = context_attention_forward(x, folded_faithful)
    jax.block_until_ready(out_faithful)
    err_faithful = float(jnp.max(jnp.abs(out_faithful - ref)))
    assert jnp.allclose(out_faithful, ref, atol=2e-4, rtol=2e-4), \
        f"faithful-path mismatch vs reference (max abs err {err_faithful})"

    print("KERNEL_OK")
</pallas_src>

<mosaic_0001>
module attributes {stable_mosaic.version = 11 : i64} {
  func.func @_ctx_attn_fast_kernel(%arg0: i32, %arg1: i32, %arg2: memref<16x128xbf16, #tpu.memory_space<vmem>>, %arg3: memref<1x128xf32, #tpu.memory_space<vmem>>, %arg4: memref<1x128xf32, #tpu.memory_space<vmem>>, %arg5: memref<1x128xf32, #tpu.memory_space<vmem>>, %arg6: memref<1x128xf32, #tpu.memory_space<vmem>>, %arg7: memref<128x128xbf16, #tpu.memory_space<vmem>>, %arg8: memref<1x128xf32, #tpu.memory_space<vmem>>, %arg9: memref<16x128xf32, #tpu.memory_space<vmem>>) attributes {dimension_semantics = [#tpu.dimension_semantics<parallel>, #tpu.dimension_semantics<parallel>], iteration_bounds = array<i64: 1, 1>, scalar_prefetch = 0 : i64, scratch_operands = 0 : i64, tpu.core_type = #tpu.core_type<tc>, window_params = [{transform_indices = @transform_0, window_bounds = array<i64: 16, 128>}, {pipeline_mode = #tpu.pipeline_mode<synchronous>, transform_indices = @transform_1, window_bounds = array<i64: 1, 128>}, {pipeline_mode = #tpu.pipeline_mode<synchronous>, transform_indices = @transform_2, window_bounds = array<i64: 1, 128>}, {pipeline_mode = #tpu.pipeline_mode<synchronous>, transform_indices = @transform_3, window_bounds = array<i64: 1, 128>}, {pipeline_mode = #tpu.pipeline_mode<synchronous>, transform_indices = @transform_4, window_bounds = array<i64: 1, 128>}, {pipeline_mode = #tpu.pipeline_mode<synchronous>, transform_indices = @transform_5, window_bounds = array<i64: 128, 128>}, {pipeline_mode = #tpu.pipeline_mode<synchronous>, transform_indices = @transform_6, window_bounds = array<i64: 1, 128>}, {transform_indices = @transform_7, window_bounds = array<i64: 16, 128>}]} {
    %c0 = arith.constant 0 : index
    %c0_0 = arith.constant 0 : index
    %0 = vector.load %arg2[%c0, %c0_0] : memref<16x128xbf16, #tpu.memory_space<vmem>>, vector<16x128xbf16>
    %1 = arith.extf %0 : vector<16x128xbf16> to vector<16x128xf32>
    %c0_1 = arith.constant 0 : index
    %c0_2 = arith.constant 0 : index
    %2 = vector.load %arg3[%c0_1, %c0_2] : memref<1x128xf32, #tpu.memory_space<vmem>>, vector<1x128xf32>
    %3 = vector.broadcast %2 : vector<1x128xf32> to vector<16x128xf32>
    %4 = arith.mulf %1, %3 : vector<16x128xf32>
    %c0_3 = arith.constant 0 : index
    %c0_4 = arith.constant 0 : index
    %5 = vector.load %arg4[%c0_3, %c0_4] : memref<1x128xf32, #tpu.memory_space<vmem>>, vector<1x128xf32>
    %6 = vector.broadcast %5 : vector<1x128xf32> to vector<16x128xf32>
    %7 = arith.addf %4, %6 : vector<16x128xf32>
    %cst = arith.constant 0.000000e+00 : f32
    %8 = vector.broadcast %cst : f32 to vector<16x128xf32>
    %9 = arith.maximumf %7, %8 : vector<16x128xf32>
    %c0_5 = arith.constant 0 : index
    %c0_6 = arith.constant 0 : index
    %10 = vector.load %arg5[%c0_5, %c0_6] : memref<1x128xf32, #tpu.memory_space<vmem>>, vector<1x128xf32>
    %11 = vector.broadcast %10 : vector<1x128xf32> to vector<16x128xf32>
    %12 = arith.mulf %9, %11 : vector<16x128xf32>
    %c0_7 = arith.constant 0 : index
    %c0_8 = arith.constant 0 : index
    %13 = vector.load %arg6[%c0_7, %c0_8] : memref<1x128xf32, #tpu.memory_space<vmem>>, vector<1x128xf32>
    %14 = vector.broadcast %13 : vector<1x128xf32> to vector<16x128xf32>
    %15 = arith.addf %12, %14 : vector<16x128xf32>
    %16 = arith.truncf %15 : vector<16x128xf32> to vector<16x128xbf16>
    %c0_9 = arith.constant 0 : index
    %c0_10 = arith.constant 0 : index
    %17 = vector.load %arg7[%c0_9, %c0_10] : memref<128x128xbf16, #tpu.memory_space<vmem>>, vector<128x128xbf16>
    %cst_11 = arith.constant dense<0.000000e+00> : vector<16x128xf32>
    %18 = tpu.matmul %16, %17, %cst_11 {dimension_numbers = #tpu.dot_dimension_numbers<[1], [0], [0], [1], [0, 0, 1, 1], [], []>} : vector<16x128xbf16>, vector<128x128xbf16>, vector<16x128xf32> -> vector<16x128xf32>
    %c0_12 = arith.constant 0 : index
    %c0_13 = arith.constant 0 : index
    %19 = vector.load %arg8[%c0_12, %c0_13] : memref<1x128xf32, #tpu.memory_space<vmem>>, vector<1x128xf32>
    %20 = vector.broadcast %19 : vector<1x128xf32> to vector<16x128xf32>
    %21 = arith.addf %18, %20 : vector<16x128xf32>
    %c0_14 = arith.constant 0 : index
    %c0_15 = arith.constant 0 : index
    %22 = vector.load %arg9[%c0_14, %c0_15] : memref<16x128xf32, #tpu.memory_space<vmem>>, vector<16x128xf32>
    tpu.vector_store %arg9[%c0_14, %c0_15], %21 {strides = array<i32>} : memref<16x128xf32, #tpu.memory_space<vmem>>, vector<16x128xf32>,
    return
  }
  func.func @transform_0(%arg0: i32, %arg1: i32) -> (i32, i32) {
    %c0_i32 = arith.constant 0 : i32
    %c0_i32_0 = arith.constant 0 : i32
    return %arg0, %c0_i32 : i32, i32
  }
  func.func @transform_1(%arg0: i32, %arg1: i32) -> (i32, i32) {
    %c0_i32 = arith.constant 0 : i32
    %c0_i32_0 = arith.constant 0 : i32
    %c0_i32_1 = arith.constant 0 : i32
    return %c0_i32, %c0_i32_0 : i32, i32
  }
  func.func @transform_2(%arg0: i32, %arg1: i32) -> (i32, i32) {
    %c0_i32 = arith.constant 0 : i32
    %c0_i32_0 = arith.constant 0 : i32
    %c0_i32_1 = arith.constant 0 : i32
    return %c0_i32, %c0_i32_0 : i32, i32
  }
  func.func @transform_3(%arg0: i32, %arg1: i32) -> (i32, i32) {
    %c0_i32 = arith.constant 0 : i32
    %c0_i32_0 = arith.constant 0 : i32
    %c0_i32_1 = arith.constant 0 : i32
    return %c0_i32, %c0_i32_0 : i32, i32
  }
  func.func @transform_4(%arg0: i32, %arg1: i32) -> (i32, i32) {
    %c0_i32 = arith.constant 0 : i32
    %c0_i32_0 = arith.constant 0 : i32
    %c0_i32_1 = arith.constant 0 : i32
    return %c0_i32, %c0_i32_0 : i32, i32
  }
  func.func @transform_5(%arg0: i32, %arg1: i32) -> (i32, i32) {
    %c0_i32 = arith.constant 0 : i32
    %c0_i32_0 = arith.constant 0 : i32
    return %c0_i32, %arg1 : i32, i32
  }
  func.func @transform_6(%arg0: i32, %arg1: i32) -> (i32, i32) {
    %c0_i32 = arith.constant 0 : i32
    %c0_i32_0 = arith.constant 0 : i32
    return %c0_i32, %arg1 : i32, i32
  }
  func.func @transform_7(%arg0: i32, %arg1: i32) -> (i32, i32) {
    %c0_i32 = arith.constant 0 : i32
    return %arg0, %arg1 : i32, i32
  }
}

module attributes {stable_mosaic.version = 11 : i64} {
  func.func @_ctx_attn_fast_kernel(%arg0: i32, %arg1: i32, %arg2: memref<16x128xbf16, #tpu.memory_space<vmem>>, %arg3: memref<1x128xf32, #tpu.memory_space<vmem>>, %arg4: memref<1x128xf32, #tpu.memory_space<vmem>>, %arg5: memref<1x128xf32, #tpu.memory_space<vmem>>, %arg6: memref<1x128xf32, #tpu.memory_space<vmem>>, %arg7: memref<128x128xbf16, #tpu.memory_space<vmem>>, %arg8: memref<1x128xf32, #tpu.memory_space<vmem>>, %arg9: memref<16x128xf32, #tpu.memory_space<vmem>>) attributes {dimension_semantics = [#tpu.dimension_semantics<parallel>, #tpu.dimension_semantics<parallel>], iteration_bounds = array<i64: 1, 1>, scalar_prefetch = 0 : i64, scratch_operands = 0 : i64, tpu.core_type = #tpu.core_type<tc>, window_params = [{transform_indices = @transform_0, window_bounds = array<i64: 16, 128>}, {pipeline_mode = #tpu.pipeline_mode<synchronous>, transform_indices = @transform_1, window_bounds = array<i64: 1, 128>}, {pipeline_mode = #tpu.pipeline_mode<synchronous>, transform_indices = @transform_2, window_bounds = array<i64: 1, 128>}, {pipeline_mode = #tpu.pipeline_mode<synchronous>, transform_indices = @transform_3, window_bounds = array<i64: 1, 128>}, {pipeline_mode = #tpu.pipeline_mode<synchronous>, transform_indices = @transform_4, window_bounds = array<i64: 1, 128>}, {transform_indices = @transform_5, window_bounds = array<i64: 128, 128>}, {transform_indices = @transform_6, window_bounds = array<i64: 1, 128>}, {transform_indices = @transform_7, window_bounds = array<i64: 16, 128>}]} {
    %c0 = arith.constant 0 : index
    %c0_0 = arith.constant 0 : index
    %0 = vector.load %arg2[%c0, %c0_0] : memref<16x128xbf16, #tpu.memory_space<vmem>>, vector<16x128xbf16>
    %1 = arith.extf %0 : vector<16x128xbf16> to vector<16x128xf32>
    %c0_1 = arith.constant 0 : index
    %c0_2 = arith.constant 0 : index
    %2 = vector.load %arg3[%c0_1, %c0_2] : memref<1x128xf32, #tpu.memory_space<vmem>>, vector<1x128xf32>
    %3 = vector.broadcast %2 : vector<1x128xf32> to vector<16x128xf32>
    %4 = arith.mulf %1, %3 : vector<16x128xf32>
    %c0_3 = arith.constant 0 : index
    %c0_4 = arith.constant 0 : index
    %5 = vector.load %arg4[%c0_3, %c0_4] : memref<1x128xf32, #tpu.memory_space<vmem>>, vector<1x128xf32>
    %6 = vector.broadcast %5 : vector<1x128xf32> to vector<16x128xf32>
    %7 = arith.addf %4, %6 : vector<16x128xf32>
    %cst = arith.constant 0.000000e+00 : f32
    %8 = vector.broadcast %cst : f32 to vector<16x128xf32>
    %9 = arith.maximumf %7, %8 : vector<16x128xf32>
    %c0_5 = arith.constant 0 : index
    %c0_6 = arith.constant 0 : index
    %10 = vector.load %arg5[%c0_5, %c0_6] : memref<1x128xf32, #tpu.memory_space<vmem>>, vector<1x128xf32>
    %11 = vector.broadcast %10 : vector<1x128xf32> to vector<16x128xf32>
    %12 = arith.mulf %9, %11 : vector<16x128xf32>
    %c0_7 = arith.constant 0 : index
    %c0_8 = arith.constant 0 : index
    %13 = vector.load %arg6[%c0_7, %c0_8] : memref<1x128xf32, #tpu.memory_space<vmem>>, vector<1x128xf32>
    %14 = vector.broadcast %13 : vector<1x128xf32> to vector<16x128xf32>
    %15 = arith.addf %12, %14 : vector<16x128xf32>
    %16 = arith.truncf %15 : vector<16x128xf32> to vector<16x128xbf16>
    %c0_9 = arith.constant 0 : index
    %c0_10 = arith.constant 0 : index
    %17 = vector.load %arg7[%c0_9, %c0_10] : memref<128x128xbf16, #tpu.memory_space<vmem>>, vector<128x128xbf16>
    %cst_11 = arith.constant dense<0.000000e+00> : vector<16x128xf32>
    %18 = tpu.matmul %16, %17, %cst_11 {dimension_numbers = #tpu.dot_dimension_numbers<[1], [0], [0], [1], [0, 0, 1, 1], [], []>} : vector<16x128xbf16>, vector<128x128xbf16>, vector<16x128xf32> -> vector<16x128xf32>
    %c0_12 = arith.constant 0 : index
    %c0_13 = arith.constant 0 : index
    %19 = vector.load %arg8[%c0_12, %c0_13] : memref<1x128xf32, #tpu.memory_space<vmem>>, vector<1x128xf32>
    %20 = vector.broadcast %19 : vector<1x128xf32> to vector<16x128xf32>
    %21 = arith.addf %18, %20 : vector<16x128xf32>
    %c0_14 = arith.constant 0 : index
    %c0_15 = arith.constant 0 : index
    %22 = vector.load %arg9[%c0_14, %c0_15] : memref<16x128xf32, #tpu.memory_space<vmem>>, vector<16x128xf32>
    tpu.vector_store %arg9[%c0_14, %c0_15], %21 {strides = array<i32>} : memref<16x128xf32, #tpu.memory_space<vmem>>, vector<16x128xf32>,
    return
  }
  func.func @transform_0(%arg0: i32, %arg1: i32) -> (i32, i32) {
    %c0_i32 = arith.constant 0 : i32
    %c0_i32_0 = arith.constant 0 : i32
    return %arg0, %c0_i32 : i32, i32
  }
  func.func @transform_1(%arg0: i32, %arg1: i32) -> (i32, i32) {
    %c0_i32 = arith.constant 0 : i32
    %c0_i32_0 = arith.constant 0 : i32
    %c0_i32_1 = arith.constant 0 : i32
    return %c0_i32, %c0_i32_0 : i32, i32
  }
  func.func @transform_2(%arg0: i32, %arg1: i32) -> (i32, i32) {
    %c0_i32 = arith.constant 0 : i32
    %c0_i32_0 = arith.constant 0 : i32
    %c0_i32_1 = arith.constant 0 : i32
    return %c0_i32, %c0_i32_0 : i32, i32
  }
  func.func @transform_3(%arg0: i32, %arg1: i32) -> (i32, i32) {
    %c0_i32 = arith.constant 0 : i32
    %c0_i32_0 = arith.constant 0 : i32
    %c0_i32_1 = arith.constant 0 : i32
    return %c0_i32, %c0_i32_0 : i32, i32
  }
  func.func @transform_4(%arg0: i32, %arg1: i32) -> (i32, i32) {
    %c0_i32 = arith.constant 0 : i32
    %c0_i32_0 = arith.constant 0 : i32
    %c0_i32_1 = arith.constant 0 : i32
    return %c0_i32, %c0_i32_0 : i32, i32
  }
  func.func @transform_5(%arg0: i32, %arg1: i32) -> (i32, i32) {
    %c0_i32 = arith.constant 0 : i32
    %c0_i32_0 = arith.constant 0 : i32
    return %c0_i32, %arg1 : i32, i32
  }
  func.func @transform_6(%arg0: i32, %arg1: i32) -> (i32, i32) {
    %c0_i32 = arith.constant 0 : i32
    %c0_i32_0 = arith.constant 0 : i32
    return %c0_i32, %arg1 : i32, i32
  }
  func.func @transform_7(%arg0: i32, %arg1: i32) -> (i32, i32) {
    %c0_i32 = arith.constant 0 : i32
    return %arg0, %arg1 : i32, i32
  }
}

</mosaic_0001>

<llo_original>
// kernel: tpu_custom_call.1
$region0: #{tpu_custom_call.1}
  #allocation0 [shape = 'u32[]', space=smem, size = 0x4, offset = 0x4, fixed_abs, tag = 'smem constant byte address 0x4 - core index']
  #allocation1 [shape = 'u32[72,128]{1,0:T(1,128)}', space=vmem, size = 0x9000, scoped, tag = 'internal scratch']
  %s0 = inlined_call_operand.hbm [shape: bf16[16,128], index: 0, kind: input, shape index: {}]
  %s1 = inlined_call_operand.hbm [shape: f32[1,128], index: 1, kind: input, shape index: {}]
  %s2 = inlined_call_operand.vmem [shape: f32[1,128], index: 2, kind: input, shape index: {}]
  %s3 = inlined_call_operand.vmem [shape: f32[1,128], index: 3, kind: input, shape index: {}]
  %s4 = inlined_call_operand.vmem [shape: f32[1,128], index: 4, kind: input, shape index: {}]
  %s5 = inlined_call_operand.hbm [shape: bf16[128,128], index: 5, kind: input, shape index: {}]
  %s6 = inlined_call_operand.vmem [shape: f32[1,128], index: 6, kind: input, shape index: {}]
  %s7 = inlined_call_operand.hbm [shape: f32[16,128], index: 7, kind: output, shape index: {}]
  %s8 = sld [smem:[#allocation0]]
  $region50: #{tpu_custom_call.1} parent=0
    _
  %s10 = ssub.s32 1, %s8
  %s11 = scalar_select 0, %s10, %s8
  $region1: #{tpu_custom_call.1} parent=0
    #allocation2 [shape = 'u8[4096]{0}', space=vmem, size = 0x1000, scoped, tag = 'input window, operand 0, single buffered']
    #allocation3 [shape = 's32[1]{0}', space=sflag, size = 0x4, scoped, tag = 'scoped memory for tpu_custom_call.1']
    #allocation4 [shape = 's32[1]{0}', space=sflag, size = 0x4, scoped, tag = 'scoped memory for tpu_custom_call.1']
    #allocation5 [shape = 'u8[512]{0}', space=vmem, size = 0x400, scoped, tag = 'input window, operand 1, single buffered']
    #allocation6 [shape = 's32[1]{0}', space=sflag, size = 0x4, scoped, tag = 'scoped memory for tpu_custom_call.1']
    #allocation7 [shape = 'u8[32768]{0}', space=vmem, size = 0x8000, scoped, tag = 'input window, operand 5, single buffered']
    #allocation8 [shape = 'u8[8192]{0}', space=vmem, size = 0x2000, scoped, tag = 'output window, operand 0, single buffered']
    %12 = vsyncpa [#allocation3], 0
    %13 = vsyncpa [#allocation6], 0
    %14 = vsyncpa [#allocation4], 0
    // Predicated region
    $region2: #{tpu_custom_call.1} parent=1 // pred_check
      _
    $region3: #{tpu_custom_call.1} parent=1 // pred_check_branch
      %16 = sbr.rel (0) target = $region5
    $region4: #{tpu_custom_call.1} parent=1 // pred_region
      %18 = vsyncadd [#allocation3], 0
      %s19 = sshll.u32 %s0, 4
      %s20 = int_to_ptr.hbm [resolvable:$true] %s19
      %s21 = sshll.u32 [#allocation2], 4
      %s22 = int_to_ptr.vmem [resolvable:$true] %s21
      %27 = dma.hbm_to_vmem [thread:$0]  %s20, 128, %s22, [#allocation3], 64, 64, 4
    $region5: #{tpu_custom_call.1} parent=1 // pred_fallthru
      _
    // Predicated region
    $region6: #{tpu_custom_call.1} parent=1 // pred_check
      _
    $region7: #{tpu_custom_call.1} parent=1 // pred_check_branch
      %29 = sbr.rel (0) target = $region9
    $region8: #{tpu_custom_call.1} parent=1 // pred_region
      %31 = vsyncadd [#allocation6], 0
      %s33 = sshll.u32 %s1, 4
      %s34 = int_to_ptr.hbm [resolvable:$true] %s33
      %s35 = sshll.u32 [#allocation5], 4
      %s36 = int_to_ptr.vmem [resolvable:$true] %s35
      %38 = dma.hbm_to_vmem [thread:$0]  %s34, 16, %s36, [#allocation6]
    $region9: #{tpu_custom_call.1} parent=1 // pred_fallthru
      _
    // Predicated region
    $region10: #{tpu_custom_call.1} parent=1 // pred_check
      _
    $region11: #{tpu_custom_call.1} parent=1 // pred_check_branch
      %40 = sbr.rel (0) target = $region13
    $region12: #{tpu_custom_call.1} parent=1 // pred_region
      _
    $region13: #{tpu_custom_call.1} parent=1 // pred_fallthru
      _
    // Predicated region
    $region14: #{tpu_custom_call.1} parent=1 // pred_check
      _
    $region15: #{tpu_custom_call.1} parent=1 // pred_check_branch
      %42 = sbr.rel (0) target = $region17
    $region16: #{tpu_custom_call.1} parent=1 // pred_region
      _
    $region17: #{tpu_custom_call.1} parent=1 // pred_fallthru
      _
    // Predicated region
    $region18: #{tpu_custom_call.1} parent=1 // pred_check
      _
    $region19: #{tpu_custom_call.1} parent=1 // pred_check_branch
      %44 = sbr.rel (0) target = $region21
    $region20: #{tpu_custom_call.1} parent=1 // pred_region
      _
    $region21: #{tpu_custom_call.1} parent=1 // pred_fallthru
      _
    // Predicated region
    $region22: #{tpu_custom_call.1} parent=1 // pred_check
      _
    $region23: #{tpu_custom_call.1} parent=1 // pred_check_branch
      %46 = sbr.rel (0) target = $region25
    $region24: #{tpu_custom_call.1} parent=1 // pred_region
      %48 = vsyncadd [#allocation6], 0
      %s49 = sshll.u32 %s5, 4
      %s50 = int_to_ptr.hbm [resolvable:$true] %s49
      %s51 = sshll.u32 [#allocation7], 4
      %s52 = int_to_ptr.vmem [resolvable:$true] %s51
      %57 = dma.hbm_to_vmem [thread:$0]  %s50, 1024, %s52, [#allocation6], 64, 64, 4
    $region25: #{tpu_custom_call.1} parent=1 // pred_fallthru
      _
    // Predicated region
    $region26: #{tpu_custom_call.1} parent=1 // pred_check
      _
    $region27: #{tpu_custom_call.1} parent=1 // pred_check_branch
      %59 = sbr.rel (0) target = $region29
    $region28: #{tpu_custom_call.1} parent=1 // pred_region
      _
    $region29: #{tpu_custom_call.1} parent=1 // pred_fallthru
      _
    // Predicated region
    $region30: #{tpu_custom_call.1} parent=1 // pred_check
      _
    $region31: #{tpu_custom_call.1} parent=1 // pred_check_branch
      %61 = sbr.rel (0) target = $region33
    $region32: #{tpu_custom_call.1} parent=1 // pred_region
      %63 = dma.done [#allocation3], 128
    $region33: #{tpu_custom_call.1} parent=1 // pred_fallthru
      _
    // Predicated region
    $region34: #{tpu_custom_call.1} parent=1 // pred_check
      _
    $region35: #{tpu_custom_call.1} parent=1 // pred_check_branch
      %65 = sbr.rel (0) target = $region37
    $region36: #{tpu_custom_call.1} parent=1 // pred_region
      %67 = dma.done [#allocation6], 16
    $region37: #{tpu_custom_call.1} parent=1 // pred_fallthru
      _
    // Predicated region
    $region38: #{tpu_custom_call.1} parent=1 // pred_check
      _
    $region39: #{tpu_custom_call.1} parent=1 // pred_check_branch
      %69 = sbr.rel (0) target = $region41
    $region40: #{tpu_custom_call.1} parent=1 // pred_region
      %71 = dma.done [#allocation6], 1024
    $region41: #{tpu_custom_call.1} parent=1 // pred_fallthru
      _
    %v72 = vld [vmem:[#allocation2] sm:$0xf]
    %v73 = vld [vmem:[#allocation2 + $0x4] sm:$0xf]
    %v74 = vunpack.c.l.bf16 %v72
    %v75 = vunpack.c.l.bf16 %v73
    %v76 = vld [vmem:[#allocation5] sm:$0x1]
    %v78 = vperm.slane %v76, 0
    %v80 = vmul.f32 %v74, %v78
    %v81 = vmul.f32 %v75, %v78
    %v82 = vld [vmem:[%s2] sm:$0x1]
    %v84 = vperm.slane %v82, 0
    %v86 = vadd.f32 %v80, %v84
    %v87 = vadd.f32 %v81, %v84
    %v88 = vmax.f32 %v86, 0.0
    %v89 = vmax.f32 %v87, 0.0
    %v90 = vld [vmem:[%s3] sm:$0x1]
    %v92 = vperm.slane %v90, 0
    %v94 = vmul.f32 %v88, %v92
    %v95 = vmul.f32 %v89, %v92
    %v96 = vld [vmem:[%s4] sm:$0x1]
    %v98 = vperm.slane %v96, 0
    %v100 = vadd.f32 %v94, %v98
    %v101 = vadd.f32 %v95, %v98
    %v102 = vpack.c.bf16 %v101, %v100
    %v103 = vld [vmem:[#allocation7] sm:$0xf]
    %v104 = vld [vmem:[#allocation7 + $0x4] sm:$0xf]
    %v105 = vld [vmem:[#allocation7 + $0x8] sm:$0xf]
    %v106 = vld [vmem:[#allocation7 + $0xc] sm:$0xf]
    %v107 = vld [vmem:[#allocation7 + $0x10] sm:$0xf]
    %v108 = vld [vmem:[#allocation7 + $0x14] sm:$0xf]
    %v109 = vld [vmem:[#allocation7 + $0x18] sm:$0xf]
    %v110 = vld [vmem:[#allocation7 + $0x1c] sm:$0xf]
    %v111 = vld [vmem:[#allocation7 + $0x20] sm:$0xf]
    %v112 = vld [vmem:[#allocation7 + $0x24] sm:$0xf]
    %v113 = vld [vmem:[#allocation7 + $0x28] sm:$0xf]
    %v114 = vld [vmem:[#allocation7 + $0x2c] sm:$0xf]
    %v115 = vld [vmem:[#allocation7 + $0x30] sm:$0xf]
    %v116 = vld [vmem:[#allocation7 + $0x34] sm:$0xf]
    %v117 = vld [vmem:[#allocation7 + $0x38] sm:$0xf]
    %v118 = vld [vmem:[#allocation7 + $0x3c] sm:$0xf]
    %v119 = vld [vmem:[%s6] sm:$0x1]
    %v121 = vperm.slane %v119, 0
    %v139 = vunpack.c.l.b16 %v103
    %v140 = vunpack.c.l.b16 %v104
    %v141 = vunpack.c.l.b16 %v105
    %v142 = vunpack.c.l.b16 %v106
    %v143 = vunpack.c.l.b16 %v107
    %v144 = vunpack.c.l.b16 %v108
    %v145 = vunpack.c.l.b16 %v109
    %v146 = vunpack.c.l.b16 %v110
    %v147 = vunpack.c.l.b16 %v111
    %v148 = vunpack.c.l.b16 %v112
    %v149 = vunpack.c.l.b16 %v113
    %v150 = vunpack.c.l.b16 %v114
    %v151 = vunpack.c.l.b16 %v115
    %v152 = vunpack.c.l.b16 %v116
    %v153 = vunpack.c.l.b16 %v117
    %v154 = vunpack.c.l.b16 %v118
    %v155 = vpack.c.b16 %v140, %v139
    %v156 = vpack.c.b16 %v142, %v141
    %v157 = vpack.c.b16 %v144, %v143
    %v158 = vpack.c.b16 %v146, %v145
    %v159 = vpack.c.b16 %v148, %v147
    %v160 = vpack.c.b16 %v150, %v149
    %v161 = vpack.c.b16 %v152, %v151
    %v162 = vpack.c.b16 %v154, %v153
    %171 = vmatpush.bf16.msra.mxu0 %v162
    %172 = vmatpush.bf16.msra.mxu0 %v161
    %173 = vmatpush.bf16.msra.mxu0 %v160
    %174 = vmatpush.bf16.msra.mxu0 %v159
    %175 = vmatpush.bf16.msra.mxu0 %v158
    %176 = vmatpush.bf16.msra.mxu0 %v157
    %177 = vmatpush.bf16.msra.mxu0 %v156
    %178 = vmatpush.bf16.msra.mxu0 %v155
    %179 = vmatmul.bf16.gmra.mxu0 %v102
    %v180 = vpop.f32.mrf.mxu0
    %v181 = vadd.f32 %v121, %v180
    %v182 = vpop.f32.mrf.mxu0
    %v183 = vadd.f32 %v121, %v182
    %184 = vdwg.mxu0
    %185 = vst [vmem:[#allocation8] sm:$0xff] %v181
    %186 = vst [vmem:[#allocation8 + $0x8] sm:$0xff] %v183
    // Predicated region
    $region42: #{tpu_custom_call.1} parent=1 // pred_check
      _
    $region43: #{tpu_custom_call.1} parent=1 // pred_check_branch
      %188 = sbr.rel (0) target = $region45
    $region44: #{tpu_custom_call.1} parent=1 // pred_region
      %190 = vsyncadd [#allocation4], 0
      %s191 = sshll.u32 [#allocation8], 4
      %s192 = int_to_ptr.vmem [resolvable:$true] %s191
      %s193 = sshll.u32 %s7, 4
      %s194 = int_to_ptr.hbm [resolvable:$true] %s193
      %199 = dma.vmem_to_hbm [thread:$0]  %s192, 256, %s194, [#allocation4], 128, 128, 8
    $region45: #{tpu_custom_call.1} parent=1 // pred_fallthru
      _
    // Predicated region
    $region46: #{tpu_custom_call.1} parent=1 // pred_check
      _
    $region47: #{tpu_custom_call.1} parent=1 // pred_check_branch
      %201 = sbr.rel (0) target = $region49
    $region48: #{tpu_custom_call.1} parent=1 // pred_region
      %203 = dma.done [#allocation4], 256
    $region49: #{tpu_custom_call.1} parent=1 // pred_fallthru
      _
    %204 = vsyncpa [#allocation3], 1
    %205 = vsyncpa [#allocation6], 1
    %206 = vsyncpa [#allocation4], 1

// kernel: tpu_custom_call.1
$region0: #{tpu_custom_call.1}
  #allocation0 [shape = 'u32[]', space=smem, size = 0x4, offset = 0x4, fixed_abs, tag = 'smem constant byte address 0x4 - core index']
  #allocation1 [shape = 'u32[72,128]{1,0:T(1,128)}', space=vmem, size = 0x9000, scoped, tag = 'internal scratch']
  %s0 = inlined_call_operand.hbm [shape: bf16[16,128], index: 0, kind: input, shape index: {}]
  %s1 = inlined_call_operand.hbm [shape: f32[1,128], index: 1, kind: input, shape index: {}]
  %s2 = inlined_call_operand.vmem [shape: f32[1,128], index: 2, kind: input, shape index: {}]
  %s3 = inlined_call_operand.vmem [shape: f32[1,128], index: 3, kind: input, shape index: {}]
  %s4 = inlined_call_operand.vmem [shape: f32[1,128], index: 4, kind: input, shape index: {}]
  %s5 = inlined_call_operand.hbm [shape: bf16[128,128], index: 5, kind: input, shape index: {}]
  %s6 = inlined_call_operand.vmem [shape: f32[1,128], index: 6, kind: input, shape index: {}]
  %s7 = inlined_call_operand.hbm [shape: f32[16,128], index: 7, kind: output, shape index: {}]
  %s8 = sld [smem:[#allocation0]]
  $region50: #{tpu_custom_call.1} parent=0
    _
  %s10 = ssub.s32 1, %s8
  %s11 = scalar_select 0, %s10, %s8
  $region1: #{tpu_custom_call.1} parent=0
    #allocation2 [shape = 'u8[4096]{0}', space=vmem, size = 0x1000, scoped, tag = 'input window, operand 0, single buffered']
    #allocation3 [shape = 's32[1]{0}', space=sflag, size = 0x4, scoped, tag = 'scoped memory for tpu_custom_call.1']
    #allocation4 [shape = 's32[1]{0}', space=sflag, size = 0x4, scoped, tag = 'scoped memory for tpu_custom_call.1']
    #allocation5 [shape = 'u8[512]{0}', space=vmem, size = 0x400, scoped, tag = 'input window, operand 1, single buffered']
    #allocation6 [shape = 's32[1]{0}', space=sflag, size = 0x4, scoped, tag = 'scoped memory for tpu_custom_call.1']
    #allocation7 [shape = 'u8[32768]{0}', space=vmem, size = 0x8000, scoped, tag = 'input window, operand 5, single buffered']
    #allocation8 [shape = 'u8[8192]{0}', space=vmem, size = 0x2000, scoped, tag = 'output window, operand 0, single buffered']
    %12 = vsyncpa [#allocation3], 0
    %13 = vsyncpa [#allocation6], 0
    %14 = vsyncpa [#allocation4], 0
    // Predicated region
    $region2: #{tpu_custom_call.1} parent=1 // pred_check
      _
    $region3: #{tpu_custom_call.1} parent=1 // pred_check_branch
      %16 = sbr.rel (0) target = $region5
    $region4: #{tpu_custom_call.1} parent=1 // pred_region
      %18 = vsyncadd [#allocation3], 0
      %s19 = sshll.u32 %s0, 4
      %s20 = int_to_ptr.hbm [resolvable:$true] %s19
      %s21 = sshll.u32 [#allocation2], 4
      %s22 = int_to_ptr.vmem [resolvable:$true] %s21
      %27 = dma.hbm_to_vmem [thread:$0]  %s20, 128, %s22, [#allocation3], 64, 64, 4
    $region5: #{tpu_custom_call.1} parent=1 // pred_fallthru
      _
    // Predicated region
    $region6: #{tpu_custom_call.1} parent=1 // pred_check
      _
    $region7: #{tpu_custom_call.1} parent=1 // pred_check_branch
      %29 = sbr.rel (0) target = $region9
    $region8: #{tpu_custom_call.1} parent=1 // pred_region
      %31 = vsyncadd [#allocation6], 0
      %s33 = sshll.u32 %s1, 4
      %s34 = int_to_ptr.hbm [resolvable:$true] %s33
      %s35 = sshll.u32 [#allocation5], 4
      %s36 = int_to_ptr.vmem [resolvable:$true] %s35
      %38 = dma.hbm_to_vmem [thread:$0]  %s34, 16, %s36, [#allocation6]
    $region9: #{tpu_custom_call.1} parent=1 // pred_fallthru
      _
    // Predicated region
    $region10: #{tpu_custom_call.1} parent=1 // pred_check
      _
    $region11: #{tpu_custom_call.1} parent=1 // pred_check_branch
      %40 = sbr.rel (0) target = $region13
    $region12: #{tpu_custom_call.1} parent=1 // pred_region
      _
    $region13: #{tpu_custom_call.1} parent=1 // pred_fallthru
      _
    // Predicated region
    $region14: #{tpu_custom_call.1} parent=1 // pred_check
      _
    $region15: #{tpu_custom_call.1} parent=1 // pred_check_branch
      %42 = sbr.rel (0) target = $region17
    $region16: #{tpu_custom_call.1} parent=1 // pred_region
      _
    $region17: #{tpu_custom_call.1} parent=1 // pred_fallthru
      _
    // Predicated region
    $region18: #{tpu_custom_call.1} parent=1 // pred_check
      _
    $region19: #{tpu_custom_call.1} parent=1 // pred_check_branch
      %44 = sbr.rel (0) target = $region21
    $region20: #{tpu_custom_call.1} parent=1 // pred_region
      _
    $region21: #{tpu_custom_call.1} parent=1 // pred_fallthru
      _
    // Predicated region
    $region22: #{tpu_custom_call.1} parent=1 // pred_check
      _
    $region23: #{tpu_custom_call.1} parent=1 // pred_check_branch
      %46 = sbr.rel (0) target = $region25
    $region24: #{tpu_custom_call.1} parent=1 // pred_region
      %48 = vsyncadd [#allocation6], 0
      %s49 = sshll.u32 %s5, 4
      %s50 = int_to_ptr.hbm [resolvable:$true] %s49
      %s51 = sshll.u32 [#allocation7], 4
      %s52 = int_to_ptr.vmem [resolvable:$true] %s51
      %57 = dma.hbm_to_vmem [thread:$0]  %s50, 1024, %s52, [#allocation6], 64, 64, 4
    $region25: #{tpu_custom_call.1} parent=1 // pred_fallthru
      _
    // Predicated region
    $region26: #{tpu_custom_call.1} parent=1 // pred_check
      _
    $region27: #{tpu_custom_call.1} parent=1 // pred_check_branch
      %59 = sbr.rel (0) target = $region29
    $region28: #{tpu_custom_call.1} parent=1 // pred_region
      _
    $region29: #{tpu_custom_call.1} parent=1 // pred_fallthru
      _
    // Predicated region
    $region30: #{tpu_custom_call.1} parent=1 // pred_check
      _
    $region31: #{tpu_custom_call.1} parent=1 // pred_check_branch
      %61 = sbr.rel (0) target = $region33
    $region32: #{tpu_custom_call.1} parent=1 // pred_region
      %63 = dma.done [#allocation3], 128
    $region33: #{tpu_custom_call.1} parent=1 // pred_fallthru
      _
    // Predicated region
    $region34: #{tpu_custom_call.1} parent=1 // pred_check
      _
    $region35: #{tpu_custom_call.1} parent=1 // pred_check_branch
      %65 = sbr.rel (0) target = $region37
    $region36: #{tpu_custom_call.1} parent=1 // pred_region
      %67 = dma.done [#allocation6], 16
    $region37: #{tpu_custom_call.1} parent=1 // pred_fallthru
      _
    // Predicated region
    $region38: #{tpu_custom_call.1} parent=1 // pred_check
      _
    $region39: #{tpu_custom_call.1} parent=1 // pred_check_branch
      %69 = sbr.rel (0) target = $region41
    $region40: #{tpu_custom_call.1} parent=1 // pred_region
      %71 = dma.done [#allocation6], 1024
    $region41: #{tpu_custom_call.1} parent=1 // pred_fallthru
      _
    %v72 = vld [vmem:[#allocation2] sm:$0xf]
    %v73 = vld [vmem:[#allocation2 + $0x4] sm:$0xf]
    %v74 = vunpack.c.l.bf16 %v72
    %v75 = vunpack.c.l.bf16 %v73
    %v76 = vld [vmem:[#allocation5] sm:$0x1]
    %v78 = vperm.slane %v76, 0
    %v80 = vmul.f32 %v74, %v78
    %v81 = vmul.f32 %v75, %v78
    %v82 = vld [vmem:[%s2] sm:$0x1]
    %v84 = vperm.slane %v82, 0
    %v86 = vadd.f32 %v80, %v84
    %v87 = vadd.f32 %v81, %v84
    %v88 = vmax.f32 %v86, 0.0
    %v89 = vmax.f32 %v87, 0.0
    %v90 = vld [vmem:[%s3] sm:$0x1]
    %v92 = vperm.slane %v90, 0
    %v94 = vmul.f32 %v88, %v92
    %v95 = vmul.f32 %v89, %v92
    %v96 = vld [vmem:[%s4] sm:$0x1]
    %v98 = vperm.slane %v96, 0
    %v100 = vadd.f32 %v94, %v98
    %v101 = vadd.f32 %v95, %v98
    %v102 = vpack.c.bf16 %v101, %v100
    %v103 = vld [vmem:[#allocation7] sm:$0xf]
    %v104 = vld [vmem:[#allocation7 + $0x4] sm:$0xf]
    %v105 = vld [vmem:[#allocation7 + $0x8] sm:$0xf]
    %v106 = vld [vmem:[#allocation7 + $0xc] sm:$0xf]
    %v107 = vld [vmem:[#allocation7 + $0x10] sm:$0xf]
    %v108 = vld [vmem:[#allocation7 + $0x14] sm:$0xf]
    %v109 = vld [vmem:[#allocation7 + $0x18] sm:$0xf]
    %v110 = vld [vmem:[#allocation7 + $0x1c] sm:$0xf]
    %v111 = vld [vmem:[#allocation7 + $0x20] sm:$0xf]
    %v112 = vld [vmem:[#allocation7 + $0x24] sm:$0xf]
    %v113 = vld [vmem:[#allocation7 + $0x28] sm:$0xf]
    %v114 = vld [vmem:[#allocation7 + $0x2c] sm:$0xf]
    %v115 = vld [vmem:[#allocation7 + $0x30] sm:$0xf]
    %v116 = vld [vmem:[#allocation7 + $0x34] sm:$0xf]
    %v117 = vld [vmem:[#allocation7 + $0x38] sm:$0xf]
    %v118 = vld [vmem:[#allocation7 + $0x3c] sm:$0xf]
    %v119 = vld [vmem:[%s6] sm:$0x1]
    %v121 = vperm.slane %v119, 0
    %v139 = vunpack.c.l.b16 %v103
    %v140 = vunpack.c.l.b16 %v104
    %v141 = vunpack.c.l.b16 %v105
    %v142 = vunpack.c.l.b16 %v106
    %v143 = vunpack.c.l.b16 %v107
    %v144 = vunpack.c.l.b16 %v108
    %v145 = vunpack.c.l.b16 %v109
    %v146 = vunpack.c.l.b16 %v110
    %v147 = vunpack.c.l.b16 %v111
    %v148 = vunpack.c.l.b16 %v112
    %v149 = vunpack.c.l.b16 %v113
    %v150 = vunpack.c.l.b16 %v114
    %v151 = vunpack.c.l.b16 %v115
    %v152 = vunpack.c.l.b16 %v116
    %v153 = vunpack.c.l.b16 %v117
    %v154 = vunpack.c.l.b16 %v118
    %v155 = vpack.c.b16 %v140, %v139
    %v156 = vpack.c.b16 %v142, %v141
    %v157 = vpack.c.b16 %v144, %v143
    %v158 = vpack.c.b16 %v146, %v145
    %v159 = vpack.c.b16 %v148, %v147
    %v160 = vpack.c.b16 %v150, %v149
    %v161 = vpack.c.b16 %v152, %v151
    %v162 = vpack.c.b16 %v154, %v153
    %171 = vmatpush.bf16.msra.mxu0 %v162
    %172 = vmatpush.bf16.msra.mxu0 %v161
    %173 = vmatpush.bf16.msra.mxu0 %v160
    %174 = vmatpush.bf16.msra.mxu0 %v159
    %175 = vmatpush.bf16.msra.mxu0 %v158
    %176 = vmatpush.bf16.msra.mxu0 %v157
    %177 = vmatpush.bf16.msra.mxu0 %v156
    %178 = vmatpush.bf16.msra.mxu0 %v155
    %179 = vmatmul.bf16.gmra.mxu0 %v102
    %v180 = vpop.f32.mrf.mxu0
    %v181 = vadd.f32 %v121, %v180
    %v182 = vpop.f32.mrf.mxu0
    %v183 = vadd.f32 %v121, %v182
    %184 = vdwg.mxu0
    %185 = vst [vmem:[#allocation8] sm:$0xff] %v181
    %186 = vst [vmem:[#allocation8 + $0x8] sm:$0xff] %v183
    // Predicated region
    $region42: #{tpu_custom_call.1} parent=1 // pred_check
      _
    $region43: #{tpu_custom_call.1} parent=1 // pred_check_branch
      %188 = sbr.rel (0) target = $region45
    $region44: #{tpu_custom_call.1} parent=1 // pred_region
      %190 = vsyncadd [#allocation4], 0
      %s191 = sshll.u32 [#allocation8], 4
      %s192 = int_to_ptr.vmem [resolvable:$true] %s191
      %s193 = sshll.u32 %s7, 4
      %s194 = int_to_ptr.hbm [resolvable:$true] %s193
      %199 = dma.vmem_to_hbm [thread:$0]  %s192, 256, %s194, [#allocation4], 128, 128, 8
    $region45: #{tpu_custom_call.1} parent=1 // pred_fallthru
      _
    // Predicated region
    $region46: #{tpu_custom_call.1} parent=1 // pred_check
      _
    $region47: #{tpu_custom_call.1} parent=1 // pred_check_branch
      %201 = sbr.rel (0) target = $region49
    $region48: #{tpu_custom_call.1} parent=1 // pred_region
      %203 = dma.done [#allocation4], 256
    $region49: #{tpu_custom_call.1} parent=1 // pred_fallthru
      _
    %204 = vsyncpa [#allocation3], 1
    %205 = vsyncpa [#allocation6], 1
    %206 = vsyncpa [#allocation4], 1

</llo_original>
